<compile_context>
chip_gen: v7x
topology: tpu7x:2x2x1
jax: 0.10.0
libtpu: 0.0.40
codegen_flags: <defaults>
</compile_context>

<pallas_src>
import math

import jax
import jax.numpy as jnp
from jax.experimental import pallas as pl
from jax.experimental.pallas import tpu as pltpu


def _gelu_exact(x):
    # PyTorch nn.GELU() default: 0.5 * x * (1 + erf(x / sqrt(2)))
    inv_sqrt2 = jnp.float32(0.7071067811865476)
    return 0.5 * x * (1.0 + jax.lax.erf(x * inv_sqrt2))


def _round_up(x, m):
    return (x + m - 1) // m * m


def fan_kernel(x_ref,
               we_ref, be_ref,
               wz1_ref, bz1_ref,
               wz2_ref, bz2_ref,
               wf_ref, bf_ref,
               o_ref):
    x = x_ref[...]
    if we_ref.shape[0] == 1:
        # input_dim == 1: a depth-1 MXU contraction wastes the systolic array;
        # a VPU broadcast multiply is a single op per output vreg.
        h = x * we_ref[...] + be_ref[...]
    else:
        h = jnp.dot(x, we_ref[...], preferred_element_type=jnp.float32) + be_ref[...]

    hidden = wz1_ref.shape[1]
    half = hidden // 2

    # Two FAN layers (num_layers=3 => num_layers-1 FANLayers), fused in-kernel.
    # Each layer is one H x H matmul; columns are laid out as
    #   [ p (+bp) | p (+bp - pi/2) | g ]
    # so cos() over the first half yields [cos(p), sin(p)] exactly.
    for wz_ref, bz_ref in ((wz1_ref, bz1_ref), (wz2_ref, bz2_ref)):
        z = jnp.dot(h, wz_ref[...], preferred_element_type=jnp.float32) + bz_ref[...]
        trig = jnp.cos(z[:, :half])
        g = _gelu_exact(z[:, half:])
        h = jnp.concatenate([trig, g], axis=-1)

    # Final projection (weights pre-padded to a lane-dense output width).
    out = jnp.dot(h, wf_ref[...], preferred_element_type=jnp.float32) + bf_ref[...]
    o_ref[...] = out.astype(o_ref.dtype)


def fan_forward(x, params, *, tile_n=512):
    """x: [N, input_dim] float32; params: flat tuple of 12 weight/bias arrays
    (weights stored pre-transposed as [in, out], biases as [1, out])."""
    (we, be, wp1, bp1, wg1, bg1, wp2, bp2, wg2, bg2, wf, bf) = params
    n, input_dim = x.shape
    hidden = we.shape[1]
    out_dim = wf.shape[1]

    # --- wrapper-time weight repacking (folds under jit; pure layout work) ---
    half_pi = jnp.float32(math.pi / 2.0)
    wz1 = jnp.concatenate([wp1, wp1, wg1], axis=1)            # [H, H]
    bz1 = jnp.concatenate([bp1, bp1 - half_pi, bg1], axis=1)  # [1, H]
    wz2 = jnp.concatenate([wp2, wp2, wg2], axis=1)
    bz2 = jnp.concatenate([bp2, bp2 - half_pi, bg2], axis=1)

    out_pad = _round_up(max(out_dim, 128), 128)
    wf_pad = jnp.zeros((hidden, out_pad), jnp.float32).at[:, :out_dim].set(wf)
    bf_pad = jnp.zeros((1, out_pad), jnp.float32).at[:, :out_dim].set(bf)

    # Batch tiling: pad N to a multiple of the tile so every block is full-extent
    # (keeps (8,128)-aligned, unmasked stores on every tile).
    tn = min(tile_n, _round_up(n, 8))
    n_pad = _round_up(n, tn)
    x_pad = x if n_pad == n else jnp.pad(x, ((0, n_pad - n), (0, 0)))
    grid = (n_pad // tn,)

    def resident(w):
        # Full-extent block + constant index_map -> stays VMEM-resident across the grid.
        return pl.BlockSpec(w.shape, lambda i: (0, 0))

    out = pl.pallas_call(
        fan_kernel,
        out_shape=jax.ShapeDtypeStruct((n_pad, out_pad), jnp.float32),
        grid=grid,
        in_specs=[
            pl.BlockSpec((tn, input_dim), lambda i: (i, 0)),
            resident(we), resident(be),
            resident(wz1), resident(bz1),
            resident(wz2), resident(bz2),
            resident(wf_pad), resident(bf_pad),
        ],
        out_specs=pl.BlockSpec((tn, out_pad), lambda i: (i, 0)),
        compiler_params=pltpu.CompilerParams(
            dimension_semantics=("parallel",)),
    )(x_pad, we, be, wz1, bz1, wz2, bz2, wf_pad, bf_pad)

    return out[:n, :out_dim]


def fan_forward_ref(x, params):
    """Pure-JAX reference (un-fused weights) for correctness checking."""
    (we, be, wp1, bp1, wg1, bg1, wp2, bp2, wg2, bg2, wf, bf) = params
    h = x @ we + be
    for wp, bp, wg, bg in ((wp1, bp1, wg1, bg1), (wp2, bp2, wg2, bg2)):
        p = h @ wp + bp
        g = _gelu_exact(h @ wg + bg)
        h = jnp.concatenate([jnp.cos(p), jnp.sin(p), g], axis=-1)
    return h @ wf + bf


def init_params(key, input_dim, hidden_dim, output_dim):
    """Deterministic synthetic parameters (weights [in, out], biases [1, out])."""
    def linear(k, fan_in, fan_out):
        kw, kb = jax.random.split(k)
        scale = 1.0 / jnp.sqrt(jnp.float32(fan_in))
        w = jax.random.uniform(kw, (fan_in, fan_out), jnp.float32, -scale, scale)
        b = jax.random.uniform(kb, (1, fan_out), jnp.float32, -scale, scale)
        return w, b

    keys = jax.random.split(key, 6)
    h4 = hidden_dim // 4
    h2 = hidden_dim - hidden_dim // 2
    we, be = linear(keys[0], input_dim, hidden_dim)
    wp1, bp1 = linear(keys[1], hidden_dim, h4)
    wg1, bg1 = linear(keys[2], hidden_dim, h2)
    wp2, bp2 = linear(keys[3], hidden_dim, h4)
    wg2, bg2 = linear(keys[4], hidden_dim, h2)
    wf, bf = linear(keys[5], hidden_dim, output_dim)
    return (we, be, wp1, bp1, wg1, bg1, wp2, bp2, wg2, bg2, wf, bf)


if __name__ == "__main__":
    # Small shapes consistent with FAN(input_dim=1, output_dim=1, hidden_dim=256, num_layers=3)
    batch, input_dim, hidden_dim, output_dim = 8, 1, 256, 1

    key = jax.random.PRNGKey(0)
    kx, kp = jax.random.split(key)
    x = jax.random.normal(kx, (batch, input_dim), jnp.float32)
    params = init_params(kp, input_dim, hidden_dim, output_dim)

    out = jax.block_until_ready(fan_forward(x, params))
    ref = jax.block_until_ready(fan_forward_ref(x, params))

    assert out.shape == (batch, output_dim)
    assert jnp.allclose(out, ref, atol=1e-4, rtol=1e-4), (out, ref)

    print("KERNEL_OK")
</pallas_src>

<mosaic_0001>
module attributes {stable_mosaic.version = 11 : i64} {
  func.func @fan_kernel(%arg0: i32, %arg1: memref<8x1xf32, #tpu.memory_space<vmem>>, %arg2: memref<1x256xf32, #tpu.memory_space<vmem>>, %arg3: memref<1x256xf32, #tpu.memory_space<vmem>>, %arg4: memref<256x256xf32, #tpu.memory_space<vmem>>, %arg5: memref<1x256xf32, #tpu.memory_space<vmem>>, %arg6: memref<256x256xf32, #tpu.memory_space<vmem>>, %arg7: memref<1x256xf32, #tpu.memory_space<vmem>>, %arg8: memref<256x128xf32, #tpu.memory_space<vmem>>, %arg9: memref<1x128xf32, #tpu.memory_space<vmem>>, %arg10: memref<8x128xf32, #tpu.memory_space<vmem>>) attributes {dimension_semantics = [#tpu.dimension_semantics<parallel>], iteration_bounds = array<i64: 1>, scalar_prefetch = 0 : i64, scratch_operands = 0 : i64, tpu.core_type = #tpu.core_type<tc>, window_params = [{transform_indices = @transform_0, window_bounds = array<i64: 8, 1>}, {pipeline_mode = #tpu.pipeline_mode<synchronous>, transform_indices = @transform_1, window_bounds = array<i64: 1, 256>}, {pipeline_mode = #tpu.pipeline_mode<synchronous>, transform_indices = @transform_2, window_bounds = array<i64: 1, 256>}, {pipeline_mode = #tpu.pipeline_mode<synchronous>, transform_indices = @transform_3, window_bounds = array<i64: 256, 256>}, {pipeline_mode = #tpu.pipeline_mode<synchronous>, transform_indices = @transform_4, window_bounds = array<i64: 1, 256>}, {pipeline_mode = #tpu.pipeline_mode<synchronous>, transform_indices = @transform_5, window_bounds = array<i64: 256, 256>}, {pipeline_mode = #tpu.pipeline_mode<synchronous>, transform_indices = @transform_6, window_bounds = array<i64: 1, 256>}, {pipeline_mode = #tpu.pipeline_mode<synchronous>, transform_indices = @transform_7, window_bounds = array<i64: 256, 128>}, {pipeline_mode = #tpu.pipeline_mode<synchronous>, transform_indices = @transform_8, window_bounds = array<i64: 1, 128>}, {transform_indices = @transform_9, window_bounds = array<i64: 8, 128>}]} {
    %c0 = arith.constant 0 : index
    %c0_0 = arith.constant 0 : index
    %0 = vector.load %arg1[%c0, %c0_0] : memref<8x1xf32, #tpu.memory_space<vmem>>, vector<8x1xf32>
    %c0_1 = arith.constant 0 : index
    %c0_2 = arith.constant 0 : index
    %1 = vector.load %arg2[%c0_1, %c0_2] : memref<1x256xf32, #tpu.memory_space<vmem>>, vector<1x256xf32>
    %2 = vector.broadcast %0 : vector<8x1xf32> to vector<8x256xf32>
    %3 = vector.broadcast %1 : vector<1x256xf32> to vector<8x256xf32>
    %4 = arith.mulf %2, %3 : vector<8x256xf32>
    %c0_3 = arith.constant 0 : index
    %c0_4 = arith.constant 0 : index
    %5 = vector.load %arg3[%c0_3, %c0_4] : memref<1x256xf32, #tpu.memory_space<vmem>>, vector<1x256xf32>
    %6 = vector.broadcast %5 : vector<1x256xf32> to vector<8x256xf32>
    %7 = arith.addf %4, %6 : vector<8x256xf32>
    %c0_5 = arith.constant 0 : index
    %c0_6 = arith.constant 0 : index
    %8 = vector.load %arg4[%c0_5, %c0_6] : memref<256x256xf32, #tpu.memory_space<vmem>>, vector<256x256xf32>
    %cst = arith.constant dense<0.000000e+00> : vector<8x256xf32>
    %9 = tpu.matmul %7, %8, %cst {dimension_numbers = #tpu.dot_dimension_numbers<[1], [0], [0], [1], [0, 0, 1, 1], [], []>} : vector<8x256xf32>, vector<256x256xf32>, vector<8x256xf32> -> vector<8x256xf32>
    %c0_7 = arith.constant 0 : index
    %c0_8 = arith.constant 0 : index
    %10 = vector.load %arg5[%c0_7, %c0_8] : memref<1x256xf32, #tpu.memory_space<vmem>>, vector<1x256xf32>
    %11 = vector.broadcast %10 : vector<1x256xf32> to vector<8x256xf32>
    %12 = arith.addf %9, %11 : vector<8x256xf32>
    %13 = vector.extract_strided_slice %12 {offsets = [0, 0], sizes = [8, 128], strides = [1, 1]} : vector<8x256xf32> to vector<8x128xf32>
    %14 = math.cos %13 : vector<8x128xf32>
    %15 = vector.extract_strided_slice %12 {offsets = [0, 128], sizes = [8, 128], strides = [1, 1]} : vector<8x256xf32> to vector<8x128xf32>
    %cst_9 = arith.constant 5.000000e-01 : f32
    %16 = vector.broadcast %cst_9 : f32 to vector<8x128xf32>
    %17 = arith.mulf %16, %15 : vector<8x128xf32>
    %cst_10 = arith.constant 0.707106769 : f32
    %18 = vector.broadcast %cst_10 : f32 to vector<8x128xf32>
    %19 = arith.mulf %15, %18 : vector<8x128xf32>
    %20 = math.erf %19 : vector<8x128xf32>
    %cst_11 = arith.constant 1.000000e+00 : f32
    %21 = vector.broadcast %cst_11 : f32 to vector<8x128xf32>
    %22 = arith.addf %21, %20 : vector<8x128xf32>
    %23 = arith.mulf %17, %22 : vector<8x128xf32>
    %24 = tpu.concatenate %14, %23 in 1 : vector<8x128xf32>, vector<8x128xf32> -> vector<8x256xf32>
    %c0_12 = arith.constant 0 : index
    %c0_13 = arith.constant 0 : index
    %25 = vector.load %arg6[%c0_12, %c0_13] : memref<256x256xf32, #tpu.memory_space<vmem>>, vector<256x256xf32>
    %cst_14 = arith.constant dense<0.000000e+00> : vector<8x256xf32>
    %26 = tpu.matmul %24, %25, %cst_14 {dimension_numbers = #tpu.dot_dimension_numbers<[1], [0], [0], [1], [0, 0, 1, 1], [], []>} : vector<8x256xf32>, vector<256x256xf32>, vector<8x256xf32> -> vector<8x256xf32>
    %c0_15 = arith.constant 0 : index
    %c0_16 = arith.constant 0 : index
    %27 = vector.load %arg7[%c0_15, %c0_16] : memref<1x256xf32, #tpu.memory_space<vmem>>, vector<1x256xf32>
    %28 = vector.broadcast %27 : vector<1x256xf32> to vector<8x256xf32>
    %29 = arith.addf %26, %28 : vector<8x256xf32>
    %30 = vector.extract_strided_slice %29 {offsets = [0, 0], sizes = [8, 128], strides = [1, 1]} : vector<8x256xf32> to vector<8x128xf32>
    %31 = math.cos %30 : vector<8x128xf32>
    %32 = vector.extract_strided_slice %29 {offsets = [0, 128], sizes = [8, 128], strides = [1, 1]} : vector<8x256xf32> to vector<8x128xf32>
    %cst_17 = arith.constant 5.000000e-01 : f32
    %33 = vector.broadcast %cst_17 : f32 to vector<8x128xf32>
    %34 = arith.mulf %33, %32 : vector<8x128xf32>
    %cst_18 = arith.constant 0.707106769 : f32
    %35 = vector.broadcast %cst_18 : f32 to vector<8x128xf32>
    %36 = arith.mulf %32, %35 : vector<8x128xf32>
    %37 = math.erf %36 : vector<8x128xf32>
    %cst_19 = arith.constant 1.000000e+00 : f32
    %38 = vector.broadcast %cst_19 : f32 to vector<8x128xf32>
    %39 = arith.addf %38, %37 : vector<8x128xf32>
    %40 = arith.mulf %34, %39 : vector<8x128xf32>
    %41 = tpu.concatenate %31, %40 in 1 : vector<8x128xf32>, vector<8x128xf32> -> vector<8x256xf32>
    %c0_20 = arith.constant 0 : index
    %c0_21 = arith.constant 0 : index
    %42 = vector.load %arg8[%c0_20, %c0_21] : memref<256x128xf32, #tpu.memory_space<vmem>>, vector<256x128xf32>
    %cst_22 = arith.constant dense<0.000000e+00> : vector<8x128xf32>
    %43 = tpu.matmul %41, %42, %cst_22 {dimension_numbers = #tpu.dot_dimension_numbers<[1], [0], [0], [1], [0, 0, 1, 1], [], []>} : vector<8x256xf32>, vector<256x128xf32>, vector<8x128xf32> -> vector<8x128xf32>
    %c0_23 = arith.constant 0 : index
    %c0_24 = arith.constant 0 : index
    %44 = vector.load %arg9[%c0_23, %c0_24] : memref<1x128xf32, #tpu.memory_space<vmem>>, vector<1x128xf32>
    %45 = vector.broadcast %44 : vector<1x128xf32> to vector<8x128xf32>
    %46 = arith.addf %43, %45 : vector<8x128xf32>
    %c0_25 = arith.constant 0 : index
    %c0_26 = arith.constant 0 : index
    %47 = vector.load %arg10[%c0_25, %c0_26] : memref<8x128xf32, #tpu.memory_space<vmem>>, vector<8x128xf32>
    tpu.vector_store %arg10[%c0_25, %c0_26], %46 {strides = array<i32>} : memref<8x128xf32, #tpu.memory_space<vmem>>, vector<8x128xf32>,
    return
  }
  func.func @transform_0(%arg0: i32) -> (i32, i32) {
    %c0_i32 = arith.constant 0 : i32
    %c0_i32_0 = arith.constant 0 : i32
    return %arg0, %c0_i32 : i32, i32
  }
  func.func @transform_1(%arg0: i32) -> (i32, i32) {
    %c0_i32 = arith.constant 0 : i32
    %c0_i32_0 = arith.constant 0 : i32
    %c0_i32_1 = arith.constant 0 : i32
    return %c0_i32, %c0_i32_0 : i32, i32
  }
  func.func @transform_2(%arg0: i32) -> (i32, i32) {
    %c0_i32 = arith.constant 0 : i32
    %c0_i32_0 = arith.constant 0 : i32
    %c0_i32_1 = arith.constant 0 : i32
    return %c0_i32, %c0_i32_0 : i32, i32
  }
  func.func @transform_3(%arg0: i32) -> (i32, i32) {
    %c0_i32 = arith.constant 0 : i32
    %c0_i32_0 = arith.constant 0 : i32
    %c0_i32_1 = arith.constant 0 : i32
    return %c0_i32, %c0_i32_0 : i32, i32
  }
  func.func @transform_4(%arg0: i32) -> (i32, i32) {
    %c0_i32 = arith.constant 0 : i32
    %c0_i32_0 = arith.constant 0 : i32
    %c0_i32_1 = arith.constant 0 : i32
    return %c0_i32, %c0_i32_0 : i32, i32
  }
  func.func @transform_5(%arg0: i32) -> (i32, i32) {
    %c0_i32 = arith.constant 0 : i32
    %c0_i32_0 = arith.constant 0 : i32
    %c0_i32_1 = arith.constant 0 : i32
    return %c0_i32, %c0_i32_0 : i32, i32
  }
  func.func @transform_6(%arg0: i32) -> (i32, i32) {
    %c0_i32 = arith.constant 0 : i32
    %c0_i32_0 = arith.constant 0 : i32
    %c0_i32_1 = arith.constant 0 : i32
    return %c0_i32, %c0_i32_0 : i32, i32
  }
  func.func @transform_7(%arg0: i32) -> (i32, i32) {
    %c0_i32 = arith.constant 0 : i32
    %c0_i32_0 = arith.constant 0 : i32
    %c0_i32_1 = arith.constant 0 : i32
    return %c0_i32, %c0_i32_0 : i32, i32
  }
  func.func @transform_8(%arg0: i32) -> (i32, i32) {
    %c0_i32 = arith.constant 0 : i32
    %c0_i32_0 = arith.constant 0 : i32
    %c0_i32_1 = arith.constant 0 : i32
    return %c0_i32, %c0_i32_0 : i32, i32
  }
  func.func @transform_9(%arg0: i32) -> (i32, i32) {
    %c0_i32 = arith.constant 0 : i32
    %c0_i32_0 = arith.constant 0 : i32
    return %arg0, %c0_i32 : i32, i32
  }
}

</mosaic_0001>

<llo_original>
// kernel: tpu_custom_call.1
$region0: #{tpu_custom_call.1}
  #allocation0 [shape = 'u32[]', space=smem, size = 0x4, offset = 0x4, fixed_abs, tag = 'smem constant byte address 0x4 - core index']
  #allocation1 [shape = 'u32[144,128]{1,0:T(1,128)}', space=vmem, size = 0x12000, scoped, tag = 'internal scratch']
  %s0 = inlined_call_operand.vmem [shape: f32[8,1], index: 0, kind: input, shape index: {}]
  %s1 = inlined_call_operand.vmem [shape: f32[1,256], index: 1, kind: input, shape index: {}]
  %s2 = inlined_call_operand.vmem [shape: f32[1,256], index: 2, kind: input, shape index: {}]
  %s3 = inlined_call_operand.hbm [shape: f32[256,256], index: 3, kind: input, shape index: {}]
  %s4 = inlined_call_operand.vmem [shape: f32[1,256], index: 4, kind: input, shape index: {}]
  %s5 = inlined_call_operand.hbm [shape: f32[256,256], index: 5, kind: input, shape index: {}]
  %s6 = inlined_call_operand.vmem [shape: f32[1,256], index: 6, kind: input, shape index: {}]
  %s7 = inlined_call_operand.hbm [shape: f32[256,128], index: 7, kind: input, shape index: {}]
  %s8 = inlined_call_operand.vmem [shape: f32[1,128], index: 8, kind: input, shape index: {}]
  %s9 = inlined_call_operand.hbm [shape: f32[8,128], index: 9, kind: output, shape index: {}]
  %s10 = sld [smem:[#allocation0]]
  $region58: #{tpu_custom_call.1} parent=0
    _
  %s12 = ssub.s32 1, %s10
  %s13 = scalar_select 0, %s12, %s10
  $region1: #{tpu_custom_call.1} parent=0
    #allocation2 [shape = 'u8[262144]{0}', space=vmem, size = 0x40000, scoped, tag = 'input window, operand 3, single buffered']
    #allocation3 [shape = 's32[1]{0}', space=sflag, size = 0x4, scoped, tag = 'scoped memory for tpu_custom_call.1']
    #allocation4 [shape = 's32[1]{0}', space=sflag, size = 0x4, scoped, tag = 'scoped memory for tpu_custom_call.1']
    #allocation5 [shape = 'u8[262144]{0}', space=vmem, size = 0x40000, scoped, tag = 'input window, operand 5, single buffered']
    #allocation6 [shape = 's32[1]{0}', space=sflag, size = 0x4, scoped, tag = 'scoped memory for tpu_custom_call.1']
    #allocation7 [shape = 'u8[131072]{0}', space=vmem, size = 0x20000, scoped, tag = 'input window, operand 7, single buffered']
    #allocation8 [shape = 'u8[4096]{0}', space=vmem, size = 0x1000, scoped, tag = 'output window, operand 0, single buffered']
    %14 = vsyncpa [#allocation3], 0
    %15 = vsyncpa [#allocation6], 0
    %16 = vsyncpa [#allocation4], 0
    // Predicated region
    $region2: #{tpu_custom_call.1} parent=1 // pred_check
      _
    $region3: #{tpu_custom_call.1} parent=1 // pred_check_branch
      %18 = sbr.rel (0) target = $region5
    $region4: #{tpu_custom_call.1} parent=1 // pred_region
      _
    $region5: #{tpu_custom_call.1} parent=1 // pred_fallthru
      _
    // Predicated region
    $region6: #{tpu_custom_call.1} parent=1 // pred_check
      _
    $region7: #{tpu_custom_call.1} parent=1 // pred_check_branch
      %20 = sbr.rel (0) target = $region9
    $region8: #{tpu_custom_call.1} parent=1 // pred_region
      _
    $region9: #{tpu_custom_call.1} parent=1 // pred_fallthru
      _
    // Predicated region
    $region10: #{tpu_custom_call.1} parent=1 // pred_check
      _
    $region11: #{tpu_custom_call.1} parent=1 // pred_check_branch
      %22 = sbr.rel (0) target = $region13
    $region12: #{tpu_custom_call.1} parent=1 // pred_region
      _
    $region13: #{tpu_custom_call.1} parent=1 // pred_fallthru
      _
    // Predicated region
    $region14: #{tpu_custom_call.1} parent=1 // pred_check
      _
    $region15: #{tpu_custom_call.1} parent=1 // pred_check_branch
      %24 = sbr.rel (0) target = $region17
    $region16: #{tpu_custom_call.1} parent=1 // pred_region
      %s26 = ssub.s32 8192, 8192
      %27 = vsyncadd [#allocation3], %s26
      %s28 = sshll.u32 [#allocation2], 4
      %s29 = int_to_ptr.vmem [resolvable:$true] %s28
      %34 = dma.hbm_to_vmem [thread:$0]  %s3, 8192, %s29, [#allocation3], 256, 256, 16
    $region17: #{tpu_custom_call.1} parent=1 // pred_fallthru
      _
    // Predicated region
    $region18: #{tpu_custom_call.1} parent=1 // pred_check
      _
    $region19: #{tpu_custom_call.1} parent=1 // pred_check_branch
      %36 = sbr.rel (0) target = $region21
    $region20: #{tpu_custom_call.1} parent=1 // pred_region
      _
    $region21: #{tpu_custom_call.1} parent=1 // pred_fallthru
      _
    // Predicated region
    $region22: #{tpu_custom_call.1} parent=1 // pred_check
      _
    $region23: #{tpu_custom_call.1} parent=1 // pred_check_branch
      %38 = sbr.rel (0) target = $region25
    $region24: #{tpu_custom_call.1} parent=1 // pred_region
      %s40 = ssub.s32 8192, 8192
      %41 = vsyncadd [#allocation6], %s40
      %s42 = sshll.u32 [#allocation5], 4
      %s43 = int_to_ptr.vmem [resolvable:$true] %s42
      %48 = dma.hbm_to_vmem [thread:$0]  %s5, 8192, %s43, [#allocation6], 256, 256, 16
    $region25: #{tpu_custom_call.1} parent=1 // pred_fallthru
      _
    // Predicated region
    $region26: #{tpu_custom_call.1} parent=1 // pred_check
      _
    $region27: #{tpu_custom_call.1} parent=1 // pred_check_branch
      %50 = sbr.rel (0) target = $region29
    $region28: #{tpu_custom_call.1} parent=1 // pred_region
      _
    $region29: #{tpu_custom_call.1} parent=1 // pred_fallthru
      _
    // Predicated region
    $region30: #{tpu_custom_call.1} parent=1 // pred_check
      _
    $region31: #{tpu_custom_call.1} parent=1 // pred_check_branch
      %52 = sbr.rel (0) target = $region33
    $region32: #{tpu_custom_call.1} parent=1 // pred_region
      %s54 = ssub.s32 4096, 4096
      %55 = vsyncadd [#allocation6], %s54
      %s56 = sshll.u32 [#allocation7], 4
      %s57 = int_to_ptr.vmem [resolvable:$true] %s56
      %62 = dma.hbm_to_vmem [thread:$0]  %s7, 4096, %s57, [#allocation6], 128, 128, 8
    $region33: #{tpu_custom_call.1} parent=1 // pred_fallthru
      _
    // Predicated region
    $region34: #{tpu_custom_call.1} parent=1 // pred_check
      _
    $region35: #{tpu_custom_call.1} parent=1 // pred_check_branch
      %64 = sbr.rel (0) target = $region37
    $region36: #{tpu_custom_call.1} parent=1 // pred_region
      _
    $region37: #{tpu_custom_call.1} parent=1 // pred_fallthru
      _
    // Predicated region
    $region38: #{tpu_custom_call.1} parent=1 // pred_check
      _
    $region39: #{tpu_custom_call.1} parent=1 // pred_check_branch
      %66 = sbr.rel (0) target = $region41
    $region40: #{tpu_custom_call.1} parent=1 // pred_region
      %67 = dma.done [#allocation3], 8192
    $region41: #{tpu_custom_call.1} parent=1 // pred_fallthru
      _
    // Predicated region
    $region42: #{tpu_custom_call.1} parent=1 // pred_check
      _
    $region43: #{tpu_custom_call.1} parent=1 // pred_check_branch
      %69 = sbr.rel (0) target = $region45
    $region44: #{tpu_custom_call.1} parent=1 // pred_region
      %70 = dma.done [#allocation6], 8192
    $region45: #{tpu_custom_call.1} parent=1 // pred_fallthru
      _
    // Predicated region
    $region46: #{tpu_custom_call.1} parent=1 // pred_check
      _
    $region47: #{tpu_custom_call.1} parent=1 // pred_check_branch
      %72 = sbr.rel (0) target = $region49
    $region48: #{tpu_custom_call.1} parent=1 // pred_region
      %73 = dma.done [#allocation6], 4096
    $region49: #{tpu_custom_call.1} parent=1 // pred_fallthru
      _
    %v74 = vld [vmem:[%s0] sm:$0xff]
    %v75 = vld [vmem:[%s1] sm:$0x3]
    %77 = vset.pattern.permute.xlu0 0
    %78 = vperm.xlu0 %77, %v74
    %v79 = vpop.permute.xlu0 %78
    %v82 = vlaneseq
    %v83 = vshrl.u32 %v82, 7
    %v84 = vsub.s32 0, %v83
    %v85 = vrot.slane %v75, %v84
    %v86 = vlaneseq
    %v87 = vshrl.u32 %v86, 7
    %v88 = vsub.s32 1, %v87
    %v89 = vrot.slane %v75, %v88
    %v92 = vmul.f32 %v79, %v85
    %v93 = vmul.f32 %v79, %v89
    %v94 = vld [vmem:[%s2] sm:$0x3]
    %v96 = vlaneseq
    %v97 = vshrl.u32 %v96, 7
    %v98 = vsub.s32 0, %v97
    %v99 = vrot.slane %v94, %v98
    %v100 = vlaneseq
    %v101 = vshrl.u32 %v100, 7
    %v102 = vsub.s32 1, %v101
    %v103 = vrot.slane %v94, %v102
    %v106 = vadd.f32 %v92, %v99
    %v107 = vadd.f32 %v93, %v103
    %v108 = vld [vmem:[#allocation2] sm:$0xff]
    %v109 = vld [vmem:[#allocation2 + $0x8] sm:$0xff]
    %v110 = vld [vmem:[#allocation2 + $0x10] sm:$0xff]
    %v111 = vld [vmem:[#allocation2 + $0x18] sm:$0xff]
    %v112 = vld [vmem:[#allocation2 + $0x20] sm:$0xff]
    %v113 = vld [vmem:[#allocation2 + $0x28] sm:$0xff]
    %v114 = vld [vmem:[#allocation2 + $0x30] sm:$0xff]
    %v115 = vld [vmem:[#allocation2 + $0x38] sm:$0xff]
    %v116 = vld [vmem:[#allocation2 + $0x40] sm:$0xff]
    %v117 = vld [vmem:[#allocation2 + $0x48] sm:$0xff]
    %v118 = vld [vmem:[#allocation2 + $0x50] sm:$0xff]
    %v119 = vld [vmem:[#allocation2 + $0x58] sm:$0xff]
    %v120 = vld [vmem:[#allocation2 + $0x60] sm:$0xff]
    %v121 = vld [vmem:[#allocation2 + $0x68] sm:$0xff]
    %v122 = vld [vmem:[#allocation2 + $0x70] sm:$0xff]
    %v123 = vld [vmem:[#allocation2 + $0x78] sm:$0xff]
    %v124 = vld [vmem:[#allocation2 + $0x80] sm:$0xff]
    %v125 = vld [vmem:[#allocation2 + $0x88] sm:$0xff]
    %v126 = vld [vmem:[#allocation2 + $0x90] sm:$0xff]
    %v127 = vld [vmem:[#allocation2 + $0x98] sm:$0xff]
    %v128 = vld [vmem:[#allocation2 + $0xa0] sm:$0xff]
    %v129 = vld [vmem:[#allocation2 + $0xa8] sm:$0xff]
    %v130 = vld [vmem:[#allocation2 + $0xb0] sm:$0xff]
    %v131 = vld [vmem:[#allocation2 + $0xb8] sm:$0xff]
    %v132 = vld [vmem:[#allocation2 + $0xc0] sm:$0xff]
    %v133 = vld [vmem:[#allocation2 + $0xc8] sm:$0xff]
    %v134 = vld [vmem:[#allocation2 + $0xd0] sm:$0xff]
    %v135 = vld [vmem:[#allocation2 + $0xd8] sm:$0xff]
    %v136 = vld [vmem:[#allocation2 + $0xe0] sm:$0xff]
    %v137 = vld [vmem:[#allocation2 + $0xe8] sm:$0xff]
    %v138 = vld [vmem:[#allocation2 + $0xf0] sm:$0xff]
    %v139 = vld [vmem:[#allocation2 + $0xf8] sm:$0xff]
    %v140 = vld [vmem:[#allocation2 + $0x100] sm:$0xff]
    %v141 = vld [vmem:[#allocation2 + $0x108] sm:$0xff]
    %v142 = vld [vmem:[#allocation2 + $0x110] sm:$0xff]
    %v143 = vld [vmem:[#allocation2 + $0x118] sm:$0xff]
    %v144 = vld [vmem:[#allocation2 + $0x120] sm:$0xff]
    %v145 = vld [vmem:[#allocation2 + $0x128] sm:$0xff]
    %v146 = vld [vmem:[#allocation2 + $0x130] sm:$0xff]
    %v147 = vld [vmem:[#allocation2 + $0x138] sm:$0xff]
    %v148 = vld [vmem:[#allocation2 + $0x140] sm:$0xff]
    %v149 = vld [vmem:[#allocation2 + $0x148] sm:$0xff]
    %v150 = vld [vmem:[#allocation2 + $0x150] sm:$0xff]
    %v151 = vld [vmem:[#allocation2 + $0x158] sm:$0xff]
    %v152 = vld [vmem:[#allocation2 + $0x160] sm:$0xff]
    %v153 = vld [vmem:[#allocation2 + $0x168] sm:$0xff]
    %v154 = vld [vmem:[#allocation2 + $0x170] sm:$0xff]
    %v155 = vld [vmem:[#allocation2 + $0x178] sm:$0xff]
    %v156 = vld [vmem:[#allocation2 + $0x180] sm:$0xff]
    %v157 = vld [vmem:[#allocation2 + $0x188] sm:$0xff]
    %v158 = vld [vmem:[#allocation2 + $0x190] sm:$0xff]
    %v159 = vld [vmem:[#allocation2 + $0x198] sm:$0xff]
    %v160 = vld [vmem:[#allocation2 + $0x1a0] sm:$0xff]
    %v161 = vld [vmem:[#allocation2 + $0x1a8] sm:$0xff]
    %v162 = vld [vmem:[#allocation2 + $0x1b0] sm:$0xff]
    %v163 = vld [vmem:[#allocation2 + $0x1b8] sm:$0xff]
    %v164 = vld [vmem:[#allocation2 + $0x1c0] sm:$0xff]
    %v165 = vld [vmem:[#allocation2 + $0x1c8] sm:$0xff]
    %v166 = vld [vmem:[#allocation2 + $0x1d0] sm:$0xff]
    %v167 = vld [vmem:[#allocation2 + $0x1d8] sm:$0xff]
    %v168 = vld [vmem:[#allocation2 + $0x1e0] sm:$0xff]
    %v169 = vld [vmem:[#allocation2 + $0x1e8] sm:$0xff]
    %v170 = vld [vmem:[#allocation2 + $0x1f0] sm:$0xff]
    %v171 = vld [vmem:[#allocation2 + $0x1f8] sm:$0xff]
    %v172 = vld [vmem:[%s4] sm:$0x3]
    %v174 = vlaneseq
    %v175 = vshrl.u32 %v174, 7
    %v176 = vsub.s32 0, %v175
    %v177 = vrot.slane %v172, %v176
    %v178 = vlaneseq
    %v179 = vshrl.u32 %v178, 7
    %v180 = vsub.s32 1, %v179
    %v181 = vrot.slane %v172, %v180
    %184 = vmatprep.subr.mxu0 %v109
    %185 = vmatpush1.msra.mxu0 %v108
    %186 = vmatprep.subr.mxu0 %v111
    %187 = vmatpush1.msra.mxu0 %v110
    %188 = vmatprep.subr.mxu0 %v113
    %189 = vmatpush1.msra.mxu0 %v112
    %190 = vmatprep.subr.mxu0 %v115
    %191 = vmatpush1.msra.mxu0 %v114
    %192 = vmatprep.subr.mxu0 %v117
    %193 = vmatpush1.msra.mxu0 %v116
    %194 = vmatprep.subr.mxu0 %v119
    %195 = vmatpush1.msra.mxu0 %v118
    %196 = vmatprep.subr.mxu0 %v121
    %197 = vmatpush1.msra.mxu0 %v120
    %198 = vmatprep.subr.mxu0 %v123
    %199 = vmatpush1.msra.mxu0 %v122
    %200 = vmatprep.subr.mxu0 %v125
    %201 = vmatpush1.msra.mxu0 %v124
    %202 = vmatprep.subr.mxu0 %v127
    %203 = vmatpush1.msra.mxu0 %v126
    %204 = vmatprep.subr.mxu0 %v129
    %205 = vmatpush1.msra.mxu0 %v128
    %206 = vmatprep.subr.mxu0 %v131
    %207 = vmatpush1.msra.mxu0 %v130
    %208 = vmatprep.subr.mxu0 %v133
    %209 = vmatpush1.msra.mxu0 %v132
    %210 = vmatprep.subr.mxu0 %v135
    %211 = vmatpush1.msra.mxu0 %v134
    %212 = vmatprep.subr.mxu0 %v137
    %213 = vmatpush1.msra.mxu0 %v136
    %214 = vmatprep.subr.mxu0 %v139
    %215 = vmatpush1.msra.mxu0 %v138
    %216 = vmatprep.subr.mxu0 %v141
    %217 = vmatpush1.msra.mxu0 %v140
    %218 = vmatprep.subr.mxu0 %v143
    %219 = vmatpush1.msra.mxu0 %v142
    %220 = vmatprep.subr.mxu0 %v145
    %221 = vmatpush1.msra.mxu0 %v144
    %222 = vmatprep.subr.mxu0 %v147
    %223 = vmatpush1.msra.mxu0 %v146
    %224 = vmatprep.subr.mxu0 %v149
    %225 = vmatpush1.msra.mxu0 %v148
    %226 = vmatprep.subr.mxu0 %v151
    %227 = vmatpush1.msra.mxu0 %v150
    %228 = vmatprep.subr.mxu0 %v153
    %229 = vmatpush1.msra.mxu0 %v152
    %230 = vmatprep.subr.mxu0 %v155
    %231 = vmatpush1.msra.mxu0 %v154
    %232 = vmatprep.subr.mxu0 %v157
    %233 = vmatpush1.msra.mxu0 %v156
    %234 = vmatprep.subr.mxu0 %v159
    %235 = vmatpush1.msra.mxu0 %v158
    %236 = vmatprep.subr.mxu0 %v161
    %237 = vmatpush1.msra.mxu0 %v160
    %238 = vmatprep.subr.mxu0 %v163
    %239 = vmatpush1.msra.mxu0 %v162
    %240 = vmatprep.subr.mxu0 %v165
    %241 = vmatpush1.msra.mxu0 %v164
    %242 = vmatprep.subr.mxu0 %v167
    %243 = vmatpush1.msra.mxu0 %v166
    %244 = vmatprep.subr.mxu0 %v169
    %245 = vmatpush1.msra.mxu0 %v168
    %246 = vmatprep.subr.mxu0 %v171
    %247 = vmatpush1.msra.mxu0 %v170
    %248 = vmatprep.mubr.f32.mxu0 %v107
    %249 = vmatmul.mubr.f32.gmra.mrb[0].mxu0 %v106
    %v250 = vpop.f32.mrb[0].mxu0
    %v251 = vadd.f32 %v177, %v250
    %v252 = vpop.f32.mrb[0].mxu0
    %v253 = vadd.f32 %v181, %v252
    %254 = vdwg.mxu0
    %v255 = vand.u32 2147483647, %v251
    %vm256 = vcmp.le.f32.partialorder %v255, 0.7853982
    %vm257 = vcmp.lt.s32.totalorder %v251, 0
    %v258 = vand.u32 %v251, 2139095040
    %v259 = vshrl.u32 %v258, 23
    %v260 = vsub.s32 %v259, 127
    %v261 = vand.u32 2147483647, %v251
    %v262 = vand.u32 %v261, 8388607
    %v263 = vor.u32 %v262, 8388608
    %v264 = vsub.s32 0, %v263
    %v265 = vadd.s32 %v260, 1
    %vm266 = vcmp.gt.s32.totalorder %v265, 0
    %v267 = vsel %vm266, %v265, 0
    %v268 = vshrl.u32 %v267, 5
    %v269 = vand.u32 %v267, 31
    %v270 = vsub.s32 32, %v269
    %v271 = vshrl.u32 683565275, %v270
    %v272 = vshll.u32 683565275, %v269
    %v273 = vshrl.u32 2475754826, %v270
    %v274 = vor.u32 %v272, %v273
    %v275 = vshll.u32 2475754826, %v269
    %v276 = vshrl.u32 2131351028, %v270
    %v277 = vor.u32 %v275, %v276
    %v278 = vshll.u32 2131351028, %v269
    %v279 = vshrl.u32 2102212464, %v270
    %v280 = vor.u32 %v278, %v279
    %v281 = vshll.u32 2102212464, %v269
    %v282 = vshrl.u32 920167782, %v270
    %v283 = vor.u32 %v281, %v282
    %v284 = vshll.u32 920167782, %v269
    %v285 = vshrl.u32 1326507024, %v270
    %v286 = vor.u32 %v284, %v285
    %vm287 = vcmp.lt.s32.totalorder %v268, 1
    %vm288 = vcmp.lt.s32.totalorder %v268, 2
    %vm289 = vcmp.lt.s32.totalorder %v268, 3
    %vm290 = vcmp.lt.s32.totalorder %v268, 4
    %v291 = vsel %vm287, %v271, %v274
    %v292 = vsel %vm290, %v280, 2102212464
    %v293 = vsel %vm289, %v277, %v292
    %v294 = vsel %vm288, %v291, %v293
    %v295 = vsel %vm287, %v274, %v277
    %v296 = vsel %vm290, %v283, 920167782
    %v297 = vsel %vm289, %v280, %v296
    %v298 = vsel %vm288, %v295, %v297
    %v299 = vsel %vm287, %v277, %v280
    %v300 = vsel %vm290, %v286, 1326507024
    %v301 = vsel %vm289, %v283, %v300
    %v302 = vsel %vm288, %v299, %v301
    %v303 = vshll.u32 %v263, 8
    %v304 = vmul.u32.u64.compose %v303, %v302
    %v305 = vextract.low.u32 %v304
    %v306 = vextract.high.u32 %v304
    %v307 = vmul.u32.u64.compose %v303, %v298
    %v308 = vextract.low.u32 %v307
    %v309 = vextract.high.u32 %v307
    %v310 = vmul.u32 %v303, %v294
    %v311 = vadd.s32 %v306, %v308
    %vm312 = vc.u32 %v306, %v308
    %v313 = vadd.s32 %v309, 1
    %v314 = vsel %vm312, %v313, %v309
    %v315 = vadd.s32 %v310, %v314
    %v316 = vadd.s32 %v315, 536870912
    %v317 = vshrl.u32 %v316, 30
    %v318 = vshll.u32 %v317, 30
    %v319 = vsub.s32 %v315, %v318
    %vm320 = vcmp.lt.s32.totalorder %v319, 0
    %v321 = vsub.s32 0, %v319
    %v322 = vsel %vm320, %v321, %v319
    %v323 = vclz %v322
    %v324 = vsub.s32 %v323, 2
    %vm325 = vcmp.gt.s32.totalorder 0, %v324
    %v326 = vsel %vm325, 0, %v324
    %v327 = vsub.s32 32, %v326
    %v328 = vshll.u32 %v319, %v326
    %v329 = vshrl.u32 %v311, %v327
    %v330 = vor.u32 %v328, %v329
    %v331 = vsub.s32 4294967266, %v326
    %v332 = vadd.s32 %v331, 127
    %v333 = vshll.u32 %v332, 23
    %v334 = vor.u32 4788187, %v333
    %v335 = vand.u32 2147483647, %v334
    %v337 = vcvt.s32.f32 %v330
    %v338 = vmul.f32 %v337, %v335
    %v339 = vxor.u32 %v338, 2147483648
    %v340 = vsel %vm257, %v339, %v338
    %v341 = vsub.s32 4, %v317
    %v342 = vsel %vm257, %v341, %v317
    %v343 = vsel %vm256, %v251, %v340
    %v344 = vsel %vm256, 0, %v342
    %v345 = vcosq.f32.pop %v343
    %v346 = vsinq.f32.pop %v343
    %vm347 = vweird.f32 %v251
    %v348 = vand.u32 %v344, 3
    %vm349 = vcmp.lt.s32.totalorder %v348, 2
    %vm350 = vcmp.eq.s32.totalorder %v348, 0
    %v351 = vxor.u32 %v346, 2147483648
    %v352 = vsel %vm350, %v345, %v351
    %vm353 = vcmp.eq.s32.totalorder %v348, 2
    %v354 = vxor.u32 %v345, 2147483648
    %v355 = vsel %vm353, %v354, %v346
    %v356 = vsel %vm349, %v352, %v355
    %v357 = vsel %vm347, nan, %v356
    %v358 = vmul.f32 %v253, 0.5
    %v359 = vmul.f32 %v253, 0.70710677
    %v360 = verf.f32.pop %v359
    %v361 = vadd.f32 %v360, 1.0
    %v362 = vmul.f32 %v358, %v361
    %v363 = vld [vmem:[#allocation5] sm:$0xff]
    %v364 = vld [vmem:[#allocation5 + $0x8] sm:$0xff]
    %v365 = vld [vmem:[#allocation5 + $0x10] sm:$0xff]
    %v366 = vld [vmem:[#allocation5 + $0x18] sm:$0xff]
    %v367 = vld [vmem:[#allocation5 + $0x20] sm:$0xff]
    %v368 = vld [vmem:[#allocation5 + $0x28] sm:$0xff]
    %v369 = vld [vmem:[#allocation5 + $0x30] sm:$0xff]
    %v370 = vld [vmem:[#allocation5 + $0x38] sm:$0xff]
    %v371 = vld [vmem:[#allocation5 + $0x40] sm:$0xff]
    %v372 = vld [vmem:[#allocation5 + $0x48] sm:$0xff]
    %v373 = vld [vmem:[#allocation5 + $0x50] sm:$0xff]
    %v374 = vld [vmem:[#allocation5 + $0x58] sm:$0xff]
    %v375 = vld [vmem:[#allocation5 + $0x60] sm:$0xff]
    %v376 = vld [vmem:[#allocation5 + $0x68] sm:$0xff]
    %v377 = vld [vmem:[#allocation5 + $0x70] sm:$0xff]
    %v378 = vld [vmem:[#allocation5 + $0x78] sm:$0xff]
    %v379 = vld [vmem:[#allocation5 + $0x80] sm:$0xff]
    %v380 = vld [vmem:[#allocation5 + $0x88] sm:$0xff]
    %v381 = vld [vmem:[#allocation5 + $0x90] sm:$0xff]
    %v382 = vld [vmem:[#allocation5 + $0x98] sm:$0xff]
    %v383 = vld [vmem:[#allocation5 + $0xa0] sm:$0xff]
    %v384 = vld [vmem:[#allocation5 + $0xa8] sm:$0xff]
    %v385 = vld [vmem:[#allocation5 + $0xb0] sm:$0xff]
    %v386 = vld [vmem:[#allocation5 + $0xb8] sm:$0xff]
    %v387 = vld [vmem:[#allocation5 + $0xc0] sm:$0xff]
    %v388 = vld [vmem:[#allocation5 + $0xc8] sm:$0xff]
    %v389 = vld [vmem:[#allocation5 + $0xd0] sm:$0xff]
    %v390 = vld [vmem:[#allocation5 + $0xd8] sm:$0xff]
    %v391 = vld [vmem:[#allocation5 + $0xe0] sm:$0xff]
    %v392 = vld [vmem:[#allocation5 + $0xe8] sm:$0xff]
    %v393 = vld [vmem:[#allocation5 + $0xf0] sm:$0xff]
    %v394 = vld [vmem:[#allocation5 + $0xf8] sm:$0xff]
    %v395 = vld [vmem:[#allocation5 + $0x100] sm:$0xff]
    %v396 = vld [vmem:[#allocation5 + $0x108] sm:$0xff]
    %v397 = vld [vmem:[#allocation5 + $0x110] sm:$0xff]
    %v398 = vld [vmem:[#allocation5 + $0x118] sm:$0xff]
    %v399 = vld [vmem:[#allocation5 + $0x120] sm:$0xff]
    %v400 = vld [vmem:[#allocation5 + $0x128] sm:$0xff]
    %v401 = vld [vmem:[#allocation5 + $0x130] sm:$0xff]
    %v402 = vld [vmem:[#allocation5 + $0x138] sm:$0xff]
    %v403 = vld [vmem:[#allocation5 + $0x140] sm:$0xff]
    %v404 = vld [vmem:[#allocation5 + $0x148] sm:$0xff]
    %v405 = vld [vmem:[#allocation5 + $0x150] sm:$0xff]
    %v406 = vld [vmem:[#allocation5 + $0x158] sm:$0xff]
    %v407 = vld [vmem:[#allocation5 + $0x160] sm:$0xff]
    %v408 = vld [vmem:[#allocation5 + $0x168] sm:$0xff]
    %v409 = vld [vmem:[#allocation5 + $0x170] sm:$0xff]
    %v410 = vld [vmem:[#allocation5 + $0x178] sm:$0xff]
    %v411 = vld [vmem:[#allocation5 + $0x180] sm:$0xff]
    %v412 = vld [vmem:[#allocation5 + $0x188] sm:$0xff]
    %v413 = vld [vmem:[#allocation5 + $0x190] sm:$0xff]
    %v414 = vld [vmem:[#allocation5 + $0x198] sm:$0xff]
    %v415 = vld [vmem:[#allocation5 + $0x1a0] sm:$0xff]
    %v416 = vld [vmem:[#allocation5 + $0x1a8] sm:$0xff]
    %v417 = vld [vmem:[#allocation5 + $0x1b0] sm:$0xff]
    %v418 = vld [vmem:[#allocation5 + $0x1b8] sm:$0xff]
    %v419 = vld [vmem:[#allocation5 + $0x1c0] sm:$0xff]
    %v420 = vld [vmem:[#allocation5 + $0x1c8] sm:$0xff]
    %v421 = vld [vmem:[#allocation5 + $0x1d0] sm:$0xff]
    %v422 = vld [vmem:[#allocation5 + $0x1d8] sm:$0xff]
    %v423 = vld [vmem:[#allocation5 + $0x1e0] sm:$0xff]
    %v424 = vld [vmem:[#allocation5 + $0x1e8] sm:$0xff]
    %v425 = vld [vmem:[#allocation5 + $0x1f0] sm:$0xff]
    %v426 = vld [vmem:[#allocation5 + $0x1f8] sm:$0xff]
    %v427 = vld [vmem:[%s6] sm:$0x3]
    %v429 = vlaneseq
    %v430 = vshrl.u32 %v429, 7
    %v431 = vsub.s32 0, %v430
    %v432 = vrot.slane %v427, %v431
    %v433 = vlaneseq
    %v434 = vshrl.u32 %v433, 7
    %v435 = vsub.s32 1, %v434
    %v436 = vrot.slane %v427, %v435
    %439 = vmatprep.subr.mxu0 %v364
    %440 = vmatpush1.msra.mxu0 %v363
    %441 = vmatprep.subr.mxu0 %v366
    %442 = vmatpush1.msra.mxu0 %v365
    %443 = vmatprep.subr.mxu0 %v368
    %444 = vmatpush1.msra.mxu0 %v367
    %445 = vmatprep.subr.mxu0 %v370
    %446 = vmatpush1.msra.mxu0 %v369
    %447 = vmatprep.subr.mxu0 %v372
    %448 = vmatpush1.msra.mxu0 %v371
    %449 = vmatprep.subr.mxu0 %v374
    %450 = vmatpush1.msra.mxu0 %v373
    %451 = vmatprep.subr.mxu0 %v376
    %452 = vmatpush1.msra.mxu0 %v375
    %453 = vmatprep.subr.mxu0 %v378
    %454 = vmatpush1.msra.mxu0 %v377
    %455 = vmatprep.subr.mxu0 %v380
    %456 = vmatpush1.msra.mxu0 %v379
    %457 = vmatprep.subr.mxu0 %v382
    %458 = vmatpush1.msra.mxu0 %v381
    %459 = vmatprep.subr.mxu0 %v384
    %460 = vmatpush1.msra.mxu0 %v383
    %461 = vmatprep.subr.mxu0 %v386
    %462 = vmatpush1.msra.mxu0 %v385
    %463 = vmatprep.subr.mxu0 %v388
    %464 = vmatpush1.msra.mxu0 %v387
    %465 = vmatprep.subr.mxu0 %v390
    %466 = vmatpush1.msra.mxu0 %v389
    %467 = vmatprep.subr.mxu0 %v392
    %468 = vmatpush1.msra.mxu0 %v391
    %469 = vmatprep.subr.mxu0 %v394
    %470 = vmatpush1.msra.mxu0 %v393
    %471 = vmatprep.subr.mxu0 %v396
    %472 = vmatpush1.msra.mxu0 %v395
    %473 = vmatprep.subr.mxu0 %v398
    %474 = vmatpush1.msra.mxu0 %v397
    %475 = vmatprep.subr.mxu0 %v400
    %476 = vmatpush1.msra.mxu0 %v399
    %477 = vmatprep.subr.mxu0 %v402
    %478 = vmatpush1.msra.mxu0 %v401
    %479 = vmatprep.subr.mxu0 %v404
    %480 = vmatpush1.msra.mxu0 %v403
    %481 = vmatprep.subr.mxu0 %v406
    %482 = vmatpush1.msra.mxu0 %v405
    %483 = vmatprep.subr.mxu0 %v408
    %484 = vmatpush1.msra.mxu0 %v407
    %485 = vmatprep.subr.mxu0 %v410
    %486 = vmatpush1.msra.mxu0 %v409
    %487 = vmatprep.subr.mxu0 %v412
    %488 = vmatpush1.msra.mxu0 %v411
    %489 = vmatprep.subr.mxu0 %v414
    %490 = vmatpush1.msra.mxu0 %v413
    %491 = vmatprep.subr.mxu0 %v416
    %492 = vmatpush1.msra.mxu0 %v415
    %493 = vmatprep.subr.mxu0 %v418
    %494 = vmatpush1.msra.mxu0 %v417
    %495 = vmatprep.subr.mxu0 %v420
    %496 = vmatpush1.msra.mxu0 %v419
    %497 = vmatprep.subr.mxu0 %v422
    %498 = vmatpush1.msra.mxu0 %v421
    %499 = vmatprep.subr.mxu0 %v424
    %500 = vmatpush1.msra.mxu0 %v423
    %501 = vmatprep.subr.mxu0 %v426
    %502 = vmatpush1.msra.mxu0 %v425
    %503 = vmatprep.mubr.f32.mxu0 %v362
    %504 = vmatmul.mubr.f32.gmra.mrb[0].mxu0 %v357
    %v505 = vpop.f32.mrb[0].mxu0
    %v506 = vadd.f32 %v432, %v505
    %v507 = vpop.f32.mrb[0].mxu0
    %v508 = vadd.f32 %v436, %v507
    %509 = vdwg.mxu0
    %v510 = vand.u32 2147483647, %v506
    %vm511 = vcmp.le.f32.partialorder %v510, 0.7853982
    %vm512 = vcmp.lt.s32.totalorder %v506, 0
    %v513 = vand.u32 %v506, 2139095040
    %v514 = vshrl.u32 %v513, 23
    %v515 = vsub.s32 %v514, 127
    %v516 = vand.u32 2147483647, %v506
    %v517 = vand.u32 %v516, 8388607
    %v518 = vor.u32 %v517, 8388608
    %v519 = vsub.s32 0, %v518
    %v520 = vadd.s32 %v515, 1
    %vm521 = vcmp.gt.s32.totalorder %v520, 0
    %v522 = vsel %vm521, %v520, 0
    %v523 = vshrl.u32 %v522, 5
    %v524 = vand.u32 %v522, 31
    %v525 = vsub.s32 32, %v524
    %v526 = vshrl.u32 683565275, %v525
    %v527 = vshll.u32 683565275, %v524
    %v528 = vshrl.u32 2475754826, %v525
    %v529 = vor.u32 %v527, %v528
    %v530 = vshll.u32 2475754826, %v524
    %v531 = vshrl.u32 2131351028, %v525
    %v532 = vor.u32 %v530, %v531
    %v533 = vshll.u32 2131351028, %v524
    %v534 = vshrl.u32 2102212464, %v525
    %v535 = vor.u32 %v533, %v534
    %v536 = vshll.u32 2102212464, %v524
    %v537 = vshrl.u32 920167782, %v525
    %v538 = vor.u32 %v536, %v537
    %v539 = vshll.u32 920167782, %v524
    %v540 = vshrl.u32 1326507024, %v525
    %v541 = vor.u32 %v539, %v540
    %vm542 = vcmp.lt.s32.totalorder %v523, 1
    %vm543 = vcmp.lt.s32.totalorder %v523, 2
    %vm544 = vcmp.lt.s32.totalorder %v523, 3
    %vm545 = vcmp.lt.s32.totalorder %v523, 4
    %v546 = vsel %vm542, %v526, %v529
    %v547 = vsel %vm545, %v535, 2102212464
    %v548 = vsel %vm544, %v532, %v547
    %v549 = vsel %vm543, %v546, %v548
    %v550 = vsel %vm542, %v529, %v532
    %v551 = vsel %vm545, %v538, 920167782
    %v552 = vsel %vm544, %v535, %v551
    %v553 = vsel %vm543, %v550, %v552
    %v554 = vsel %vm542, %v532, %v535
    %v555 = vsel %vm545, %v541, 1326507024
    %v556 = vsel %vm544, %v538, %v555
    %v557 = vsel %vm543, %v554, %v556
    %v558 = vshll.u32 %v518, 8
    %v559 = vmul.u32.u64.compose %v558, %v557
    %v560 = vextract.low.u32 %v559
    %v561 = vextract.high.u32 %v559
    %v562 = vmul.u32.u64.compose %v558, %v553
    %v563 = vextract.low.u32 %v562
    %v564 = vextract.high.u32 %v562
    %v565 = vmul.u32 %v558, %v549
    %v566 = vadd.s32 %v561, %v563
    %vm567 = vc.u32 %v561, %v563
    %v568 = vadd.s32 %v564, 1
    %v569 = vsel %vm567, %v568, %v564
    %v570 = vadd.s32 %v565, %v569
    %v571 = vadd.s32 %v570, 536870912
    %v572 = vshrl.u32 %v571, 30
    %v573 = vshll.u32 %v572, 30
    %v574 = vsub.s32 %v570, %v573
    %vm575 = vcmp.lt.s32.totalorder %v574, 0
    %v576 = vsub.s32 0, %v574
    %v577 = vsel %vm575, %v576, %v574
    %v578 = vclz %v577
    %v579 = vsub.s32 %v578, 2
    %vm580 = vcmp.gt.s32.totalorder 0, %v579
    %v581 = vsel %vm580, 0, %v579
    %v582 = vsub.s32 32, %v581
    %v583 = vshll.u32 %v574, %v581
    %v584 = vshrl.u32 %v566, %v582
    %v585 = vor.u32 %v583, %v584
    %v586 = vsub.s32 4294967266, %v581
    %v587 = vadd.s32 %v586, 127
    %v588 = vshll.u32 %v587, 23
    %v589 = vor.u32 4788187, %v588
    %v590 = vand.u32 2147483647, %v589
    %v592 = vcvt.s32.f32 %v585
    %v593 = vmul.f32 %v592, %v590
    %v594 = vxor.u32 %v593, 2147483648
    %v595 = vsel %vm512, %v594, %v593
    %v596 = vsub.s32 4, %v572
    %v597 = vsel %vm512, %v596, %v572
    %v598 = vsel %vm511, %v506, %v595
    %v599 = vsel %vm511, 0, %v597
    %v600 = vcosq.f32.pop %v598
    %v601 = vsinq.f32.pop %v598
    %vm602 = vweird.f32 %v506
    %v603 = vand.u32 %v599, 3
    %vm604 = vcmp.lt.s32.totalorder %v603, 2
    %vm605 = vcmp.eq.s32.totalorder %v603, 0
    %v606 = vxor.u32 %v601, 2147483648
    %v607 = vsel %vm605, %v600, %v606
    %vm608 = vcmp.eq.s32.totalorder %v603, 2
    %v609 = vxor.u32 %v600, 2147483648
    %v610 = vsel %vm608, %v609, %v601
    %v611 = vsel %vm604, %v607, %v610
    %v612 = vsel %vm602, nan, %v611
    %v613 = vmul.f32 %v508, 0.5
    %v614 = vmul.f32 %v508, 0.70710677
    %v615 = verf.f32.pop %v614
    %v616 = vadd.f32 %v615, 1.0
    %v617 = vmul.f32 %v613, %v616
    %v618 = vld [vmem:[#allocation7] sm:$0xff]
    %v619 = vld [vmem:[#allocation7 + $0x8] sm:$0xff]
    %v620 = vld [vmem:[#allocation7 + $0x10] sm:$0xff]
    %v621 = vld [vmem:[#allocation7 + $0x18] sm:$0xff]
    %v622 = vld [vmem:[#allocation7 + $0x20] sm:$0xff]
    %v623 = vld [vmem:[#allocation7 + $0x28] sm:$0xff]
    %v624 = vld [vmem:[#allocation7 + $0x30] sm:$0xff]
    %v625 = vld [vmem:[#allocation7 + $0x38] sm:$0xff]
    %v626 = vld [vmem:[#allocation7 + $0x40] sm:$0xff]
    %v627 = vld [vmem:[#allocation7 + $0x48] sm:$0xff]
    %v628 = vld [vmem:[#allocation7 + $0x50] sm:$0xff]
    %v629 = vld [vmem:[#allocation7 + $0x58] sm:$0xff]
    %v630 = vld [vmem:[#allocation7 + $0x60] sm:$0xff]
    %v631 = vld [vmem:[#allocation7 + $0x68] sm:$0xff]
    %v632 = vld [vmem:[#allocation7 + $0x70] sm:$0xff]
    %v633 = vld [vmem:[#allocation7 + $0x78] sm:$0xff]
    %v634 = vld [vmem:[#allocation7 + $0x80] sm:$0xff]
    %v635 = vld [vmem:[#allocation7 + $0x88] sm:$0xff]
    %v636 = vld [vmem:[#allocation7 + $0x90] sm:$0xff]
    %v637 = vld [vmem:[#allocation7 + $0x98] sm:$0xff]
    %v638 = vld [vmem:[#allocation7 + $0xa0] sm:$0xff]
    %v639 = vld [vmem:[#allocation7 + $0xa8] sm:$0xff]
    %v640 = vld [vmem:[#allocation7 + $0xb0] sm:$0xff]
    %v641 = vld [vmem:[#allocation7 + $0xb8] sm:$0xff]
    %v642 = vld [vmem:[#allocation7 + $0xc0] sm:$0xff]
    %v643 = vld [vmem:[#allocation7 + $0xc8] sm:$0xff]
    %v644 = vld [vmem:[#allocation7 + $0xd0] sm:$0xff]
    %v645 = vld [vmem:[#allocation7 + $0xd8] sm:$0xff]
    %v646 = vld [vmem:[#allocation7 + $0xe0] sm:$0xff]
    %v647 = vld [vmem:[#allocation7 + $0xe8] sm:$0xff]
    %v648 = vld [vmem:[#allocation7 + $0xf0] sm:$0xff]
    %v649 = vld [vmem:[#allocation7 + $0xf8] sm:$0xff]
    %v650 = vld [vmem:[%s8] sm:$0x1]
    %v652 = vlaneseq
    %v653 = vshrl.u32 %v652, 7
    %v654 = vsub.s32 0, %v653
    %v655 = vrot.slane %v650, %v654
    %657 = vmatprep.subr.mxu0 0.0
    %658 = vmatpush1.msra.mxu0 %v618
    %659 = vmatprep.subr.mxu0 0.0
    %660 = vmatpush1.msra.mxu0 %v619
    %661 = vmatprep.subr.mxu0 0.0
    %662 = vmatpush1.msra.mxu0 %v620
    %663 = vmatprep.subr.mxu0 0.0
    %664 = vmatpush1.msra.mxu0 %v621
    %665 = vmatprep.subr.mxu0 0.0
    %666 = vmatpush1.msra.mxu0 %v622
    %667 = vmatprep.subr.mxu0 0.0
    %668 = vmatpush1.msra.mxu0 %v623
    %669 = vmatprep.subr.mxu0 0.0
    %670 = vmatpush1.msra.mxu0 %v624
    %671 = vmatprep.subr.mxu0 0.0
    %672 = vmatpush1.msra.mxu0 %v625
    %673 = vmatprep.subr.mxu0 0.0
    %674 = vmatpush1.msra.mxu0 %v626
    %675 = vmatprep.subr.mxu0 0.0
    %676 = vmatpush1.msra.mxu0 %v627
    %677 = vmatprep.subr.mxu0 0.0
    %678 = vmatpush1.msra.mxu0 %v628
    %679 = vmatprep.subr.mxu0 0.0
    %680 = vmatpush1.msra.mxu0 %v629
    %681 = vmatprep.subr.mxu0 0.0
    %682 = vmatpush1.msra.mxu0 %v630
    %683 = vmatprep.subr.mxu0 0.0
    %684 = vmatpush1.msra.mxu0 %v631
    %685 = vmatprep.subr.mxu0 0.0
    %686 = vmatpush1.msra.mxu0 %v632
    %687 = vmatprep.subr.mxu0 0.0
    %688 = vmatpush1.msra.mxu0 %v633
    %689 = vmatprep.subr.mxu0 0.0
    %690 = vmatpush1.msra.mxu0 %v634
    %691 = vmatprep.subr.mxu0 0.0
    %692 = vmatpush1.msra.mxu0 %v635
    %693 = vmatprep.subr.mxu0 0.0
    %694 = vmatpush1.msra.mxu0 %v636
    %695 = vmatprep.subr.mxu0 0.0
    %696 = vmatpush1.msra.mxu0 %v637
    %697 = vmatprep.subr.mxu0 0.0
    %698 = vmatpush1.msra.mxu0 %v638
    %699 = vmatprep.subr.mxu0 0.0
    %700 = vmatpush1.msra.mxu0 %v639
    %701 = vmatprep.subr.mxu0 0.0
    %702 = vmatpush1.msra.mxu0 %v640
    %703 = vmatprep.subr.mxu0 0.0
    %704 = vmatpush1.msra.mxu0 %v641
    %705 = vmatprep.subr.mxu0 0.0
    %706 = vmatpush1.msra.mxu0 %v642
    %707 = vmatprep.subr.mxu0 0.0
    %708 = vmatpush1.msra.mxu0 %v643
    %709 = vmatprep.subr.mxu0 0.0
    %710 = vmatpush1.msra.mxu0 %v644
    %711 = vmatprep.subr.mxu0 0.0
    %712 = vmatpush1.msra.mxu0 %v645
    %713 = vmatprep.subr.mxu0 0.0
    %714 = vmatpush1.msra.mxu0 %v646
    %715 = vmatprep.subr.mxu0 0.0
    %716 = vmatpush1.msra.mxu0 %v647
    %717 = vmatprep.subr.mxu0 0.0
    %718 = vmatpush1.msra.mxu0 %v648
    %719 = vmatprep.subr.mxu0 0.0
    %720 = vmatpush1.msra.mxu0 %v649
    %721 = vmatprep.mubr.f32.mxu0 %v617
    %722 = vmatmul.mubr.f32.gmra.mrb[0].mxu0 %v612
    %v723 = vpop.f32.mrb[0].mxu0
    %v724 = vadd.f32 %v655, %v723
    %v725 = vpop.f32.mrb[0].mxu0
    %726 = vdwg.mxu0
    %727 = vst [vmem:[#allocation8] sm:$0xff] %v724
    // Predicated region
    $region50: #{tpu_custom_call.1} parent=1 // pred_check
      _
    $region51: #{tpu_custom_call.1} parent=1 // pred_check_branch
      %729 = sbr.rel (0) target = $region53
    $region52: #{tpu_custom_call.1} parent=1 // pred_region
      %s731 = ssub.s32 128, 128
      %732 = vsyncadd [#allocation4], %s731
      %s734 = sshll.u32 [#allocation8], 4
      %s735 = int_to_ptr.vmem [resolvable:$true] %s734
      %737 = dma.vmem_to_hbm [thread:$0]  %s735, 128, %s9, [#allocation4]
    $region53: #{tpu_custom_call.1} parent=1 // pred_fallthru
      _
    // Predicated region
    $region54: #{tpu_custom_call.1} parent=1 // pred_check
      _
    $region55: #{tpu_custom_call.1} parent=1 // pred_check_branch
      %739 = sbr.rel (0) target = $region57
    $region56: #{tpu_custom_call.1} parent=1 // pred_region
      %740 = dma.done [#allocation4], 128
    $region57: #{tpu_custom_call.1} parent=1 // pred_fallthru
      _
    %741 = vsyncpa [#allocation3], 1
    %742 = vsyncpa [#allocation6], 1
    %743 = vsyncpa [#allocation4], 1

</llo_original>
